<compile_context>
chip_gen: v5e
topology: v5e:2x2
jax: 0.10.0
libtpu: 0.0.40
codegen_flags: <defaults>
</compile_context>

<pallas_src>
import jax
import jax.numpy as jnp
from jax.experimental import pallas as pl
from jax.experimental.pallas import tpu as pltpu


def graph_node_feature_kernel(x_ref, feat_ref, emb_ref, out_ref):
    # x_ref:    (1, N, Tn)   soft-adjacency column slab for this node tile
    # feat_ref: (1, Tn, Hp)  node features (lane-dense hidden dim)
    # emb_ref:  (D, Hp)      degree-embedding table (resident across the grid)
    # out_ref:  (1, Tn, Hp)
    D = emb_ref.shape[0]
    Tn = x_ref.shape[2]

    # degree[j] = ceil(sum_i x[i, j]) for the Tn nodes of this tile -> (1, Tn)
    deg = jnp.sum(x_ref[0].astype(jnp.float32), axis=0, keepdims=True)
    # PyTorch nn.Embedding would raise on out-of-range indices; here they are
    # deterministically clamped into [0, D-1] (negative sums map to the padding row).
    idx = jnp.clip(jnp.ceil(deg).astype(jnp.int32), 0, D - 1)              # (1, Tn)

    # One-hot in transposed orientation, built directly in the embedding dtype:
    # 0/1 is exact in bf16, so a bf16 table keeps the gather exact while the MXU
    # runs at bf16 rate (f32 accumulation below).
    row_iota = jax.lax.broadcasted_iota(jnp.int32, (D, Tn), 0)             # (D, Tn)
    onehot_t = (row_iota == idx).astype(emb_ref.dtype)                     # (D, Tn)

    # embedding lookup = onehot_t^T @ emb  (single MXU contraction over D)
    lookup = jax.lax.dot_general(
        onehot_t, emb_ref[...],
        dimension_numbers=(((0,), (0,)), ((), ())),
        preferred_element_type=jnp.float32)                                # (Tn, Hp)

    out_ref[0] = (feat_ref[0].astype(jnp.float32) + lookup).astype(out_ref.dtype)


def graph_node_feature(x, feat, emb, *, node_tile=None):
    """x: (B, N, N), feat: (B, N, H), emb: (D, H). Returns (B, N, H)."""
    B, N, _ = x.shape
    H = feat.shape[-1]
    D = emb.shape[0]

    LANES = 128
    Hp = ((H + LANES - 1) // LANES) * LANES
    # Lane-dense hidden dim: pad feat/emb once in the wrapper so kernel stores are
    # full-width. (In real use, pad the parameters once at init, not per call.)
    if Hp != H:
        feat_p = jnp.pad(feat, ((0, 0), (0, 0), (0, Hp - H)))
        emb_p = jnp.pad(emb, ((0, 0), (0, Hp - H)))
    else:
        feat_p, emb_p = feat, emb

    # Node (column) tiling of x: per-step VMEM is N*node_tile instead of N*N.
    if node_tile is None:
        node_tile = N if N <= 128 else 128
    assert node_tile == N or (node_tile % 128 == 0 and N % node_tile == 0), (
        "node_tile must equal N or be a multiple of 128 that divides N")
    n_tiles = N // node_tile

    def nbytes(dt):
        return jnp.dtype(dt).itemsize

    # Per-step VMEM footprint (x slab + feat block + out block + emb table),
    # doubled for double-buffering, plus headroom for in-kernel intermediates.
    blk_bytes = (N * node_tile * nbytes(x.dtype)
                 + 2 * node_tile * Hp * nbytes(feat.dtype)
                 + D * Hp * nbytes(emb_p.dtype))
    vmem_limit = int(min(max(4 * blk_bytes + (4 << 20), 16 << 20), 56 << 20))

    cost = pl.CostEstimate(
        flops=int(2 * B * N * D * Hp + B * N * N + B * N * Hp),
        transcendentals=0,
        bytes_accessed=int(x.size * nbytes(x.dtype)
                           + feat_p.size * nbytes(feat.dtype)
                           + emb_p.size * nbytes(emb_p.dtype)
                           + B * N * Hp * nbytes(feat.dtype)))

    out_p = pl.pallas_call(
        graph_node_feature_kernel,
        out_shape=jax.ShapeDtypeStruct((B, N, Hp), feat.dtype),
        grid=(B, n_tiles),
        in_specs=[
            pl.BlockSpec((1, N, node_tile), lambda b, t: (b, 0, t)),   # x column slab
            pl.BlockSpec((1, node_tile, Hp), lambda b, t: (b, t, 0)),  # feat
            pl.BlockSpec((D, Hp), lambda b, t: (0, 0)),                # embedding table
        ],
        out_specs=pl.BlockSpec((1, node_tile, Hp), lambda b, t: (b, t, 0)),
        compiler_params=pltpu.CompilerParams(
            dimension_semantics=("parallel", "parallel"),
            vmem_limit_bytes=vmem_limit),
        cost_estimate=cost,
    )(x, feat_p, emb_p)

    return out_p[..., :H] if Hp != H else out_p


if __name__ == "__main__":
    key = jax.random.PRNGKey(0)
    k1, k2, k3 = jax.random.split(key, 3)

    B = 4             # batch of graphs (real grid axis -> pipelining + megacore)
    N = 16            # nodes per graph; x[b] is the (N, N) soft adjacency matrix
    H = 32            # hidden_dim (padded to 128 lanes inside the wrapper)
    num_degree = 64   # embedding rows; ceil(column sums) <= N < num_degree here

    x = jax.random.uniform(k1, (B, N, N), dtype=jnp.float32)     # entries in [0, 1)
    feat = jax.random.normal(k2, (B, N, H), dtype=jnp.float32)

    # nn.Embedding(num_degree, hidden_dim, padding_idx=0): N(0,1) init, row 0 zeroed.
    # Stored in bf16 so the in-kernel one-hot contraction uses the bf16 MXU path
    # (the gather itself stays exact); the kernel accepts f32 tables unchanged.
    emb = jax.random.normal(k3, (num_degree, H), dtype=jnp.float32)
    emb = emb.at[0].set(0.0).astype(jnp.bfloat16)

    out = graph_node_feature(x, feat, emb)
    out = jax.block_until_ready(out)

    # pure-JAX reference: degree[b, j] = ceil(sum_i x[b, i, j]); out = feat + emb[degree]
    deg = jnp.ceil(x.sum(axis=1)).astype(jnp.int32)
    ref = feat + emb[deg].astype(jnp.float32)

    assert out.shape == (B, N, H)
    assert jnp.allclose(out, ref, atol=1e-5, rtol=1e-5)

    print("KERNEL_OK")
</pallas_src>

<mosaic_0001>
module attributes {stable_mosaic.version = 11 : i64} {
  func.func @graph_node_feature_kernel(%arg0: i32, %arg1: i32, %arg2: memref<1x16x16xf32, #tpu.memory_space<vmem>>, %arg3: memref<1x16x128xf32, #tpu.memory_space<vmem>>, %arg4: memref<64x128xbf16, #tpu.memory_space<vmem>>, %arg5: memref<1x16x128xf32, #tpu.memory_space<vmem>>) attributes {dimension_semantics = [#tpu.dimension_semantics<parallel>, #tpu.dimension_semantics<parallel>], iteration_bounds = array<i64: 4, 1>, scalar_prefetch = 0 : i64, scratch_operands = 0 : i64, tpu.core_type = #tpu.core_type<tc>, window_params = [{transform_indices = @transform_0, window_bounds = array<i64: 1, 16, 16>}, {transform_indices = @transform_1, window_bounds = array<i64: 1, 16, 128>}, {pipeline_mode = #tpu.pipeline_mode<synchronous>, transform_indices = @transform_2, window_bounds = array<i64: 64, 128>}, {transform_indices = @transform_3, window_bounds = array<i64: 1, 16, 128>}]} {
    %c0 = arith.constant 0 : index
    %c0_0 = arith.constant 0 : index
    %c0_1 = arith.constant 0 : index
    %0 = vector.load %arg2[%c0, %c0_0, %c0_1] : memref<1x16x16xf32, #tpu.memory_space<vmem>>, vector<1x16x16xf32>
    %1 = vector.shape_cast %0 : vector<1x16x16xf32> to vector<16x16xf32>
    %cst = arith.constant dense<0.000000e+00> : vector<16xf32>
    %2 = vector.multi_reduction <add>, %1, %cst [0] : vector<16x16xf32> to vector<16xf32>
    %3 = vector.shape_cast %2 : vector<16xf32> to vector<1x16xf32>
    %4 = math.ceil %3 : vector<1x16xf32>
    %5 = arith.fptosi %4 : vector<1x16xf32> to vector<1x16xi32>
    %c0_i32 = arith.constant 0 : i32
    %c63_i32 = arith.constant 63 : i32
    %6 = vector.broadcast %c0_i32 : i32 to vector<1x16xi32>
    %7 = arith.maxsi %6, %5 : vector<1x16xi32>
    %8 = vector.broadcast %c63_i32 : i32 to vector<1x16xi32>
    %9 = arith.minsi %8, %7 : vector<1x16xi32>
    %10 = tpu.iota {dimensions = array<i32: 0>} : vector<64x16xi32>
    %11 = vector.broadcast %9 : vector<1x16xi32> to vector<64x16xi32>
    %12 = arith.cmpi eq, %10, %11 : vector<64x16xi32>
    %13 = arith.extui %12 : vector<64x16xi1> to vector<64x16xi32>
    %14 = arith.sitofp %13 : vector<64x16xi32> to vector<64x16xf32>
    %15 = arith.truncf %14 : vector<64x16xf32> to vector<64x16xbf16>
    %c0_2 = arith.constant 0 : index
    %c0_3 = arith.constant 0 : index
    %16 = vector.load %arg4[%c0_2, %c0_3] : memref<64x128xbf16, #tpu.memory_space<vmem>>, vector<64x128xbf16>
    %cst_4 = arith.constant dense<0.000000e+00> : vector<16x128xf32>
    %17 = tpu.matmul %15, %16, %cst_4 {dimension_numbers = #tpu.dot_dimension_numbers<[0], [0], [1], [1], [0, 1, 1, 1], [], []>} : vector<64x16xbf16>, vector<64x128xbf16>, vector<16x128xf32> -> vector<16x128xf32>
    %c0_5 = arith.constant 0 : index
    %c0_6 = arith.constant 0 : index
    %c0_7 = arith.constant 0 : index
    %18 = vector.load %arg3[%c0_5, %c0_6, %c0_7] : memref<1x16x128xf32, #tpu.memory_space<vmem>>, vector<1x16x128xf32>
    %19 = vector.shape_cast %18 : vector<1x16x128xf32> to vector<16x128xf32>
    %20 = arith.addf %19, %17 : vector<16x128xf32>
    %c0_8 = arith.constant 0 : index
    %c0_9 = arith.constant 0 : index
    %c0_10 = arith.constant 0 : index
    %21 = vector.load %arg5[%c0_8, %c0_9, %c0_10] : memref<1x16x128xf32, #tpu.memory_space<vmem>>, vector<1x16x128xf32>
    %22 = vector.shape_cast %21 : vector<1x16x128xf32> to vector<16x128xf32>
    %23 = vector.shape_cast %20 : vector<16x128xf32> to vector<1x16x128xf32>
    tpu.vector_store %arg5[%c0_8, %c0_9, %c0_10], %23 {strides = array<i32>} : memref<1x16x128xf32, #tpu.memory_space<vmem>>, vector<1x16x128xf32>,
    return
  }
  func.func @transform_0(%arg0: i32, %arg1: i32) -> (i32, i32, i32) {
    %c0_i32 = arith.constant 0 : i32
    %c0_i32_0 = arith.constant 0 : i32
    return %arg0, %c0_i32, %arg1 : i32, i32, i32
  }
  func.func @transform_1(%arg0: i32, %arg1: i32) -> (i32, i32, i32) {
    %c0_i32 = arith.constant 0 : i32
    %c0_i32_0 = arith.constant 0 : i32
    return %arg0, %arg1, %c0_i32 : i32, i32, i32
  }
  func.func @transform_2(%arg0: i32, %arg1: i32) -> (i32, i32) {
    %c0_i32 = arith.constant 0 : i32
    %c0_i32_0 = arith.constant 0 : i32
    %c0_i32_1 = arith.constant 0 : i32
    return %c0_i32, %c0_i32_0 : i32, i32
  }
  func.func @transform_3(%arg0: i32, %arg1: i32) -> (i32, i32, i32) {
    %c0_i32 = arith.constant 0 : i32
    %c0_i32_0 = arith.constant 0 : i32
    return %arg0, %arg1, %c0_i32 : i32, i32, i32
  }
}

</mosaic_0001>

<llo_original>
// kernel: tpu_custom_call.1
$region0: #{tpu_custom_call.1}
  #allocation0 [shape = 'u32[]', space=smem, size = 0x4, offset = 0x4, fixed_abs, tag = 'smem constant byte address 0x4 - core index']
  #allocation1 [shape = 'u32[72,128]{1,0:T(1,128)}', space=vmem, size = 0x9000, scoped, tag = 'internal scratch']
  %s0 = inlined_call_operand.hbm [shape: f32[4,16,16], index: 0, kind: input, shape index: {}]
  %s1 = inlined_call_operand.hbm [shape: f32[4,16,128], index: 1, kind: input, shape index: {}]
  %s2 = inlined_call_operand.hbm [shape: bf16[64,128], index: 2, kind: input, shape index: {}]
  %s3 = inlined_call_operand.hbm [shape: f32[4,16,128], index: 3, kind: output, shape index: {}]
  %s4 = sld [smem:[#allocation0]]
  $region57: #{tpu_custom_call.1} parent=0
    _
  %s6 = ssub.s32 1, %s4
  %s7 = scalar_select 0, %s6, %s4
  $region1: #{tpu_custom_call.1} parent=0
    #allocation2 [shape = 'u8[16384]{0}', space=vmem, size = 0x4000, scoped, tag = 'input window, operand 0']
    #allocation3 [shape = 's32[2]{0}', space=sflag, size = 0x8, scoped, tag = 'scoped memory for tpu_custom_call.1']
    #allocation4 [shape = 's32[2]{0}', space=sflag, size = 0x8, scoped, tag = 'scoped memory for tpu_custom_call.1']
    #allocation5 [shape = 'u8[16384]{0}', space=vmem, size = 0x4000, scoped, tag = 'input window, operand 1']
    #allocation6 [shape = 's32[2]{0}', space=sflag, size = 0x8, scoped, tag = 'scoped memory for tpu_custom_call.1']
    #allocation7 [shape = 'u8[16384]{0}', space=vmem, size = 0x4000, scoped, tag = 'input window, operand 2, single buffered']
    #allocation8 [shape = 'u8[16384]{0}', space=vmem, size = 0x4000, scoped, tag = 'output window, operand 0']
    %8 = vsyncpa [#allocation3], 0
    %s9 = scalar_lea.sflag [#allocation3], 1
    %10 = vsyncpa %s9, 0
    %11 = vsyncpa [#allocation6], 0
    %s12 = scalar_lea.sflag [#allocation6], 1
    %13 = vsyncpa %s12, 0
    %14 = vsyncpa [#allocation4], 0
    %s15 = scalar_lea.sflag [#allocation4], 1
    %16 = vsyncpa %s15, 0
    loop: start=0, step=1, limit=6
    $region2: #{tpu_custom_call.1} parent=1 // loop_pre_header
      _
    $region3: #{tpu_custom_call.1} parent=1 // loop_header
      %s18 = sphi 0, %s22
      %p19 = scmp.ge.s32.totalorder %s18, 6
      %s25 = sphi 0, %s37
      %s26 = sphi 0, %s33
      %s27 = sphi 0, %s25
      %s28 = sphi 0, %s26
      %s29 = sphi 0, %s27
      %s30 = sphi 0, %s28
      %s42 = sphi 0, %s44
      %s45 = sphi 0, %s42
      %s46 = sphi 0, %s45
      %s62 = sphi 0, %s46
      %s70 = sphi 0, %s72
      %s73 = sphi 0, %s70
      %s74 = sphi 0, %s73
      %s90 = sphi 0, %s74
      %s94 = sphi 0, %s94
      %s96 = sphi 0, %s94
      %s97 = sphi 0, %s96
      %s111 = sphi 0, %s97
      %s119 = sphi 0, %s121
      %s122 = sphi 0, %s119
      %s123 = sphi 0, %s122
      %s139 = sphi 0, %s123
    $region4: #{tpu_custom_call.1} parent=1 // loop_header_branch
      %21 = sbr.rel (%p19) target = $region8
    $region5: #{tpu_custom_call.1} parent=1 // loop_body
      %s23 = ssub.s32 %s18, 1
      %s24 = ssub.s32 %s18, 2
      %s31 = sadd.s32 1, %s26
      %p32 = scmp.ge.s32.totalorder %s31, 1
      %s33 = scalar_select %p32, 0, %s31
      %s34 = sadd.s32 1, %s25
      %s35 = scalar_select %p32, %s34, %s25
      %p36 = scmp.ge.s32.totalorder %s35, 4
      %s37 = scalar_select %p36, 0, %s35
      %s38 = ssub.s32 %s25, %s37
      %s39 = ssub.s32 %s26, %s33
      %s40 = sor.u32 %s38, %s39
      %p41 = scmp.eq.s32.totalorder %s40, 0
      %s43 = sadd.s32 %s42, 1
      %s44 = scalar_select %p41, %s42, %s43
      %p47 = pneg %p41
      %p48 = scmp.eq.s32.totalorder %s18, 3
      %p49 = por %p47, %p48
      %p50 = scmp.ne.s32.totalorder %s42, %s45
      %p51 = scmp.eq.s32.totalorder %s18, 0
      %p52 = por %p50, %p51
      %p53 = scmp.ne.s32.totalorder %s42, %s45
      %p54 = scmp.eq.s32.totalorder %s23, 3
      %p55 = por %p53, %p54
      %p56 = scmp.ne.s32.totalorder %s45, %s46
      %p57 = scmp.eq.s32.totalorder %s23, 0
      %p58 = por %p56, %p57
      %p59 = scmp.ne.s32.totalorder %s45, %s46
      %p60 = scmp.eq.s32.totalorder %s24, 3
      %p61 = por %p59, %p60
      %p63 = scmp.ne.s32.totalorder %s46, %s62
      %p64 = scmp.eq.s32.totalorder %s24, 0
      %p65 = por %p63, %p64
      %s66 = ssub.s32 %s25, %s37
      %s67 = ssub.s32 %s26, %s33
      %s68 = sor.u32 %s66, %s67
      %p69 = scmp.eq.s32.totalorder %s68, 0
      %s71 = sadd.s32 %s70, 1
      %s72 = scalar_select %p69, %s70, %s71
      %p75 = pneg %p69
      %p76 = scmp.eq.s32.totalorder %s18, 3
      %p77 = por %p75, %p76
      %p78 = scmp.ne.s32.totalorder %s70, %s73
      %p79 = scmp.eq.s32.totalorder %s18, 0
      %p80 = por %p78, %p79
      %p81 = scmp.ne.s32.totalorder %s70, %s73
      %p82 = scmp.eq.s32.totalorder %s23, 3
      %p83 = por %p81, %p82
      %p84 = scmp.ne.s32.totalorder %s73, %s74
      %p85 = scmp.eq.s32.totalorder %s23, 0
      %p86 = por %p84, %p85
      %p87 = scmp.ne.s32.totalorder %s73, %s74
      %p88 = scmp.eq.s32.totalorder %s24, 3
      %p89 = por %p87, %p88
      %p91 = scmp.ne.s32.totalorder %s74, %s90
      %p92 = scmp.eq.s32.totalorder %s24, 0
      %p93 = por %p91, %p92
      %s95 = sadd.s32 %s94, 1
      %p98 = scmp.eq.s32.totalorder %s18, 3
      %p99 = scmp.ne.s32.totalorder %s94, %s96
      %p100 = scmp.eq.s32.totalorder %s18, 0
      %p101 = por %p99, %p100
      %p102 = scmp.ne.s32.totalorder %s94, %s96
      %p103 = scmp.eq.s32.totalorder %s23, 3
      %p104 = por %p102, %p103
      %p105 = scmp.ne.s32.totalorder %s96, %s97
      %p106 = scmp.eq.s32.totalorder %s23, 0
      %p107 = por %p105, %p106
      %p108 = scmp.ne.s32.totalorder %s96, %s97
      %p109 = scmp.eq.s32.totalorder %s24, 3
      %p110 = por %p108, %p109
      %p112 = scmp.ne.s32.totalorder %s97, %s111
      %p113 = scmp.eq.s32.totalorder %s24, 0
      %p114 = por %p112, %p113
      %s115 = ssub.s32 %s25, %s37
      %s116 = ssub.s32 %s26, %s33
      %s117 = sor.u32 %s115, %s116
      %p118 = scmp.eq.s32.totalorder %s117, 0
      %s120 = sadd.s32 %s119, 1
      %s121 = scalar_select %p118, %s119, %s120
      %p124 = pneg %p118
      %p125 = scmp.eq.s32.totalorder %s18, 3
      %p126 = por %p124, %p125
      %p127 = scmp.ne.s32.totalorder %s119, %s122
      %p128 = scmp.eq.s32.totalorder %s18, 0
      %p129 = por %p127, %p128
      %p130 = scmp.ne.s32.totalorder %s119, %s122
      %p131 = scmp.eq.s32.totalorder %s23, 3
      %p132 = por %p130, %p131
      %p133 = scmp.ne.s32.totalorder %s122, %s123
      %p134 = scmp.eq.s32.totalorder %s23, 0
      %p135 = por %p133, %p134
      %p136 = scmp.ne.s32.totalorder %s122, %s123
      %p137 = scmp.eq.s32.totalorder %s24, 3
      %p138 = por %p136, %p137
      %p140 = scmp.ne.s32.totalorder %s123, %s139
      %p141 = scmp.eq.s32.totalorder %s24, 0
      %p142 = por %p140, %p141
      %p143 = scmp.le.s32.totalorder 1, %s18
      %p144 = scmp.lt.s32.totalorder %s18, 5
      %p145 = pnand %p143, %p144
      %p146 = pneg %p145
      // Predicated region
      $region9: #{tpu_custom_call.1} parent=5 // pred_check
        _
      $region10: #{tpu_custom_call.1} parent=5 // pred_check_branch
        %148 = sbr.rel (%p145) target = $region12
      $region11: #{tpu_custom_call.1} parent=5 // pred_region
        %s149 = ssub.s32 %s18, 1
        // Predicated region
        $region13: #{tpu_custom_call.1} parent=11 // pred_check
          %p150 = pneg %p107
        $region14: #{tpu_custom_call.1} parent=11 // pred_check_branch
          %152 = sbr.rel (%p150) target = $region16
        $region15: #{tpu_custom_call.1} parent=11 // pred_region
          %154 = vsyncadd [#allocation6], 0
          %s155 = sshll.u32 %s2, 4
          %s156 = int_to_ptr.hbm [resolvable:$true] %s155
          %s157 = sshll.u32 [#allocation7], 4
          %s158 = int_to_ptr.vmem [resolvable:$true] %s157
          %163 = dma.hbm_to_vmem [thread:$0]  %s156, 512, %s158, [#allocation6], 64, 64, 4
        $region16: #{tpu_custom_call.1} parent=11 // pred_fallthru
          _
      $region12: #{tpu_custom_call.1} parent=5 // pred_fallthru
        _
      %p164 = scmp.lt.s32.totalorder %s18, 4
      // Predicated region
      $region17: #{tpu_custom_call.1} parent=5 // pred_check
        %p165 = pneg %p164
      $region18: #{tpu_custom_call.1} parent=5 // pred_check_branch
        %167 = sbr.rel (%p165) target = $region20
      $region19: #{tpu_custom_call.1} parent=5 // pred_region
        // Predicated region
        $region21: #{tpu_custom_call.1} parent=19 // pred_check
          %p168 = pneg %p52
        $region22: #{tpu_custom_call.1} parent=19 // pred_check_branch
          %170 = sbr.rel (%p168) target = $region24
        $region23: #{tpu_custom_call.1} parent=19 // pred_region
          %s171 = sand.u32 %s42, 1
          %s172 = scalar_lea.sflag [#allocation3], %s171
          %s173 = sand.u32 %s42, 1
          %s174 = smul.addr %s173, 16
          %s175 = scalar_lea.vmem [#allocation2], %s174
          %177 = vsyncadd %s172, 0
          %s178 = smul.addr %s25, 2
          %s179 = sadd.s32 %s26, %s178
          %s180 = smul.addr %s179, 8
          %s181 = scalar_lea.hbm %s0, %s180
          %s182 = sshll.u32 %s181, 4
          %s183 = int_to_ptr.hbm [resolvable:$true] %s182
          %s184 = sshll.u32 %s175, 4
          %s185 = int_to_ptr.vmem [resolvable:$true] %s184
          %190 = dma.hbm_to_vmem [thread:$0]  %s183, 256, %s185, %s172, 128, 128, 8
        $region24: #{tpu_custom_call.1} parent=19 // pred_fallthru
          _
        // Predicated region
        $region25: #{tpu_custom_call.1} parent=19 // pred_check
          %p191 = pneg %p80
        $region26: #{tpu_custom_call.1} parent=19 // pred_check_branch
          %193 = sbr.rel (%p191) target = $region28
        $region27: #{tpu_custom_call.1} parent=19 // pred_region
          %s194 = sand.u32 %s18, 1
          %s195 = scalar_lea.sflag [#allocation6], %s194
          %s196 = sand.u32 %s70, 1
          %s197 = smul.addr %s196, 16
          %s198 = scalar_lea.vmem [#allocation5], %s197
          %s199 = smul.u32 2, %s26
          %201 = vsyncadd %s195, 0
          %s202 = smul.addr %s25, 2
          %s203 = sadd.s32 %s199, %s202
          %s204 = smul.addr %s203, 8
          %s205 = scalar_lea.hbm %s1, %s204
          %s206 = sshll.u32 %s205, 4
          %s207 = int_to_ptr.hbm [resolvable:$true] %s206
          %s208 = sshll.u32 %s198, 4
          %s209 = int_to_ptr.vmem [resolvable:$true] %s208
          %214 = dma.hbm_to_vmem [thread:$0]  %s207, 256, %s209, %s195, 128, 128, 8
        $region28: #{tpu_custom_call.1} parent=19 // pred_fallthru
          _
      $region20: #{tpu_custom_call.1} parent=5 // pred_fallthru
        _
      %p215 = scmp.le.s32.totalorder 1, %s18
      %p216 = scmp.lt.s32.totalorder %s18, 5
      %p217 = pnand %p215, %p216
      %p218 = pneg %p217
      // Predicated region
      $region29: #{tpu_custom_call.1} parent=5 // pred_check
        _
      $region30: #{tpu_custom_call.1} parent=5 // pred_check_branch
        %220 = sbr.rel (%p217) target = $region32
      $region31: #{tpu_custom_call.1} parent=5 // pred_region
        %s221 = ssub.s32 %s18, 1
        %s222 = sand.u32 %s45, 1
        %s223 = scalar_lea.sflag [#allocation3], %s222
        %s224 = sand.u32 %s45, 1
        %s225 = smul.addr %s224, 16
        %s226 = scalar_lea.vmem [#allocation2], %s225
        // Predicated region
        $region33: #{tpu_custom_call.1} parent=31 // pred_check
          %p227 = pneg %p58
        $region34: #{tpu_custom_call.1} parent=31 // pred_check_branch
          %229 = sbr.rel (%p227) target = $region36
        $region35: #{tpu_custom_call.1} parent=31 // pred_region
          %231 = dma.done %s223, 256
        $region36: #{tpu_custom_call.1} parent=31 // pred_fallthru
          _
        %s232 = sand.u32 %s23, 1
        %s233 = scalar_lea.sflag [#allocation6], %s232
        %s234 = sand.u32 %s73, 1
        %s235 = smul.addr %s234, 16
        %s236 = scalar_lea.vmem [#allocation5], %s235
        // Predicated region
        $region37: #{tpu_custom_call.1} parent=31 // pred_check
          %p237 = pneg %p86
        $region38: #{tpu_custom_call.1} parent=31 // pred_check_branch
          %239 = sbr.rel (%p237) target = $region40
        $region39: #{tpu_custom_call.1} parent=31 // pred_region
          %241 = dma.done %s233, 256
        $region40: #{tpu_custom_call.1} parent=31 // pred_fallthru
          _
        // Predicated region
        $region41: #{tpu_custom_call.1} parent=31 // pred_check
          %p242 = pneg %p107
        $region42: #{tpu_custom_call.1} parent=31 // pred_check_branch
          %244 = sbr.rel (%p242) target = $region44
        $region43: #{tpu_custom_call.1} parent=31 // pred_region
          %246 = dma.done [#allocation6], 512
        $region44: #{tpu_custom_call.1} parent=31 // pred_fallthru
          _
        %s247 = sand.u32 %s45, 1
        %s248 = scalar_lea.sflag [#allocation3], %s247
        %s249 = sand.u32 %s45, 1
        %s250 = smul.addr %s249, 16
        %s251 = scalar_lea.vmem [#allocation2], %s250
        %p252 = pneg %p58
        %p253 = pneg %p55
        %s254 = sand.u32 %s23, 1
        %s255 = scalar_lea.sflag [#allocation6], %s254
        %s256 = sand.u32 %s73, 1
        %s257 = smul.addr %s256, 16
        %s258 = scalar_lea.vmem [#allocation5], %s257
        %p259 = pneg %p86
        %p260 = pneg %p83
        %p261 = pneg %p107
        %p262 = pneg %p104
        %p263 = pneg %p135
        %p264 = pneg %p132
        %s265 = sand.u32 %s122, 1
        %s266 = scalar_lea.sflag [#allocation4], %s265
        %s267 = sand.u32 %s122, 1
        %s268 = smul.addr %s267, 16
        %s269 = scalar_lea.vmem [#allocation8], %s268
        %s270 = smul.u32 2, %s28
        %s271 = smul.u32 2, %s28
        %v273 = vld [vmem:[%s226] sm:$0xff]
        %v274 = vld [vmem:[%s226 + $0x8] sm:$0xff]
        %vm275 = vcmask 130048
        %v276 = vsel %vm275, %v273, 0.0
        %v277 = vsel %vm275, %v274, 0.0
        %v278 = vadd.f32 %v276, %v277
        %v279 = vrot.slane %v278, 4
        %v280 = vadd.f32 %v278, %v279
        %v281 = vrot.slane %v280, 2
        %v282 = vadd.f32 %v280, %v281
        %v283 = vrot.slane %v282, 1
        %v284 = vadd.f32 %v282, %v283
        %v285 = vceil.f32 %v284
        %v286 = vcvt.f32.s32.to.zero.pseudo %v285
        %vm287 = vcmp.gt.s32.totalorder %v286, 0
        %v288 = vsel %vm287, %v286, 0
        %vm289 = vcmp.lt.s32.totalorder %v288, 63
        %v290 = vsel %vm289, %v288, 63
        %v291 = vlaneseq
        %v292 = vshrl.u32 %v291, 7
        %v293 = vadd.s32 %v292, 8
        %v294 = vadd.s32 %v292, 16
        %v295 = vadd.s32 %v292, 24
        %v296 = vadd.s32 %v292, 32
        %v297 = vadd.s32 %v292, 40
        %v298 = vadd.s32 %v292, 48
        %v299 = vadd.s32 %v292, 56
        %vm300 = vcmp.eq.s32.totalorder %v292, %v290
        %vm301 = vcmp.eq.s32.totalorder %v293, %v290
        %vm302 = vcmp.eq.s32.totalorder %v294, %v290
        %vm303 = vcmp.eq.s32.totalorder %v295, %v290
        %vm304 = vcmp.eq.s32.totalorder %v296, %v290
        %vm305 = vcmp.eq.s32.totalorder %v297, %v290
        %vm306 = vcmp.eq.s32.totalorder %v298, %v290
        %vm307 = vcmp.eq.s32.totalorder %v299, %v290
        %v308 = vsel %vm300, 1, 0
        %v309 = vsel %vm301, 1, 0
        %v310 = vsel %vm302, 1, 0
        %v311 = vsel %vm303, 1, 0
        %v312 = vsel %vm304, 1, 0
        %v313 = vsel %vm305, 1, 0
        %v314 = vsel %vm306, 1, 0
        %v315 = vsel %vm307, 1, 0
        %v316 = vcvt.s32.f32 %v308
        %v317 = vcvt.s32.f32 %v309
        %v318 = vcvt.s32.f32 %v310
        %v319 = vcvt.s32.f32 %v311
        %v320 = vcvt.s32.f32 %v312
        %v321 = vcvt.s32.f32 %v313
        %v322 = vcvt.s32.f32 %v314
        %v323 = vcvt.s32.f32 %v315
        %v324 = vpack.c.bf16 %v317, %v316
        %v325 = vpack.c.bf16 %v319, %v318
        %v326 = vpack.c.bf16 %v321, %v320
        %v327 = vpack.c.bf16 %v323, %v322
        %v328 = vld [vmem:[#allocation7] sm:$0xf]
        %v329 = vld [vmem:[#allocation7 + $0x4] sm:$0xf]
        %v330 = vld [vmem:[#allocation7 + $0x8] sm:$0xf]
        %v331 = vld [vmem:[#allocation7 + $0xc] sm:$0xf]
        %v332 = vld [vmem:[#allocation7 + $0x10] sm:$0xf]
        %v333 = vld [vmem:[#allocation7 + $0x14] sm:$0xf]
        %v334 = vld [vmem:[#allocation7 + $0x18] sm:$0xf]
        %v335 = vld [vmem:[#allocation7 + $0x1c] sm:$0xf]
        %336 = vxpose.xlu0.c.b16.start [1/8] %v324, 128
        %337 = vxpose.xlu0.c.b16.cont [2/8] %v325, 128
        %338 = vxpose.xlu0.c.b16.cont [3/8] %v326, 128
        %339 = vxpose.xlu0.c.b16.cont [4/8] %v327, 128
        %340 = vxpose.xlu0.c.b16.cont [5/8] 0, 128
        %341 = vxpose.xlu0.c.b16.cont [6/8] 0, 128
        %342 = vxpose.xlu0.c.b16.cont [7/8] 0, 128
        %343 = vxpose.xlu0.c.b16.end [8/8] 0, 128
        %v344 = vpop.trf.xlu0
        %v345 = vpop.trf.xlu0
        %v346 = vpop.trf.xlu0
        %v347 = vpop.trf.xlu0
        %v348 = vpop.trf.xlu0
        %v349 = vpop.trf.xlu0
        %v350 = vpop.trf.xlu0
        %v351 = vpop.trf.xlu0
        %v360 = vunpack.c.l.b16 %v328
        %v361 = vunpack.c.l.b16 %v329
        %v362 = vunpack.c.l.b16 %v330
        %v363 = vunpack.c.l.b16 %v331
        %v364 = vunpack.c.l.b16 %v332
        %v365 = vunpack.c.l.b16 %v333
        %v366 = vunpack.c.l.b16 %v334
        %v367 = vunpack.c.l.b16 %v335
        %v368 = vpack.c.b16 %v361, %v360
        %v369 = vpack.c.b16 %v363, %v362
        %v370 = vpack.c.b16 %v365, %v364
        %v371 = vpack.c.b16 %v367, %v366
        %vm376 = vcmask 523264
        %v378 = vsel %vm376, %v344, 0
        %380 = vmatpush.bf16.msra.mxu0 0
        %381 = vmatpush.bf16.msra.mxu0 0
        %382 = vmatpush.bf16.msra.mxu0 0
        %383 = vmatpush.bf16.msra.mxu0 0
        %384 = vmatpush.bf16.msra.mxu0 %v371
        %385 = vmatpush.bf16.msra.mxu0 %v370
        %386 = vmatpush.bf16.msra.mxu0 %v369
        %387 = vmatpush.bf16.msra.mxu0 %v368
        %388 = vmatmul.bf16.gmra.mxu0 %v378
        %v389 = vpop.f32.mrf.mxu0
        %v390 = vadd.f32 0.0, %v389
        %v391 = vpop.f32.mrf.mxu0
        %v392 = vadd.f32 0.0, %v391
        %393 = vdwg.mxu0
        %v394 = vld [vmem:[%s236] sm:$0xff]
        %v395 = vld [vmem:[%s236 + $0x8] sm:$0xff]
        %v396 = vadd.f32 %v394, %v390
        %v397 = vadd.f32 %v395, %v392
        %398 = vst [vmem:[%s269] sm:$0xff] %v396
        %399 = vst [vmem:[%s269 + $0x8] sm:$0xff] %v397
        %s400 = sand.u32 %s122, 1
        %s401 = scalar_lea.sflag [#allocation4], %s400
        %s402 = sand.u32 %s122, 1
        %s403 = smul.addr %s402, 16
        %s404 = scalar_lea.vmem [#allocation8], %s403
        // Predicated region
        $region45: #{tpu_custom_call.1} parent=31 // pred_check
          %p405 = pneg %p132
        $region46: #{tpu_custom_call.1} parent=31 // pred_check_branch
          %407 = sbr.rel (%p405) target = $region48
        $region47: #{tpu_custom_call.1} parent=31 // pred_region
          %s408 = smul.u32 2, %s28
          %410 = vsyncadd %s401, 0
          %s411 = smul.addr %s27, 2
          %s412 = sadd.s32 %s408, %s411
          %s413 = smul.addr %s412, 8
          %s414 = scalar_lea.hbm %s3, %s413
          %s415 = sshll.u32 %s404, 4
          %s416 = int_to_ptr.vmem [resolvable:$true] %s415
          %s417 = sshll.u32 %s414, 4
          %s418 = int_to_ptr.hbm [resolvable:$true] %s417
          %423 = dma.vmem_to_hbm [thread:$0]  %s416, 256, %s418, %s401, 128, 128, 8
        $region48: #{tpu_custom_call.1} parent=31 // pred_fallthru
          _
      $region32: #{tpu_custom_call.1} parent=5 // pred_fallthru
        _
      %p424 = scmp.le.s32.totalorder 2, %s18
      // Predicated region
      $region49: #{tpu_custom_call.1} parent=5 // pred_check
        %p425 = pneg %p424
      $region50: #{tpu_custom_call.1} parent=5 // pred_check_branch
        %427 = sbr.rel (%p425) target = $region52
      $region51: #{tpu_custom_call.1} parent=5 // pred_region
        %s428 = ssub.s32 %s18, 2
        // Predicated region
        $region53: #{tpu_custom_call.1} parent=51 // pred_check
          %p429 = pneg %p138
        $region54: #{tpu_custom_call.1} parent=51 // pred_check_branch
          %431 = sbr.rel (%p429) target = $region56
        $region55: #{tpu_custom_call.1} parent=51 // pred_region
          %s432 = sand.u32 %s123, 1
          %s433 = scalar_lea.sflag [#allocation4], %s432
          %s434 = sand.u32 %s123, 1
          %s435 = smul.addr %s434, 16
          %s436 = scalar_lea.vmem [#allocation8], %s435
          %438 = dma.done %s433, 256
        $region56: #{tpu_custom_call.1} parent=51 // pred_fallthru
          _
      $region52: #{tpu_custom_call.1} parent=5 // pred_fallthru
        _
    $region6: #{tpu_custom_call.1} parent=1 // loop_footer
      %s22 = sadd.s32 1, %s18
    $region7: #{tpu_custom_call.1} parent=1 // loop_footer_branch
      %17 = sbr.rel target = $region3
    $region8: #{tpu_custom_call.1} parent=1 // loop_exit
      _
    %439 = vsyncpa [#allocation3], 1
    %s440 = scalar_lea.sflag [#allocation3], 1
    %441 = vsyncpa %s440, 1
    %442 = vsyncpa [#allocation6], 1
    %s443 = scalar_lea.sflag [#allocation6], 1
    %444 = vsyncpa %s443, 1
    %445 = vsyncpa [#allocation4], 1
    %s446 = scalar_lea.sflag [#allocation4], 1
    %447 = vsyncpa %s446, 1

</llo_original>
